<compile_context>
chip_gen: v7x
topology: tpu7x:2x2x1
jax: 0.10.0
libtpu: 0.0.40
codegen_flags: <defaults>
</compile_context>

<pallas_src>
import functools

import jax
import jax.numpy as jnp
from jax.experimental import pallas as pl
from jax.experimental.pallas import tpu as pltpu

BN_EPS = 1e-5
LANE = 128
VMEM_LIMIT = 32 * 1024 * 1024
STATS_SPLIT = 2        # leading "parallel" axis of the stats pass (v7x megacore)
MIN_GRID_TILES = 4     # keep >= 4 batch tiles on the gridded path (megacore)


def _round_up(x, m):
    return (x + m - 1) // m * m


def _pad2(a, rows, cols):
    return jnp.pad(a, ((0, rows - a.shape[0]), (0, cols - a.shape[1])))


# ---------------------------------------------------------------------------
# Kernels
# ---------------------------------------------------------------------------
def _fused_kernel(obs_ref, act_ref, gamma_ref, beta_ref,
                  w1_ref, w2h_ref, w2a_ref, b2_ref, w3_ref, b3_ref,
                  out_ref, *, tb, batch):
    """Whole (row-padded) batch lives in one tile: BN stats computed inline."""
    # layer 1 (bias dropped: exactly cancelled by training-mode BN mean sub)
    h = jnp.dot(obs_ref[...], w1_ref[...], preferred_element_type=jnp.float32)

    # Batch reductions ride the MXU via a ones-row matmul.  Zero-padded batch
    # rows give h == 0 exactly (zero obs rows, no bias), so no mask is needed.
    ones_row = jnp.ones((1, tb), jnp.float32)
    inv_b = 1.0 / batch
    mean = jnp.dot(ones_row, h, preferred_element_type=jnp.float32) * inv_b
    var = (jnp.dot(ones_row, h * h, preferred_element_type=jnp.float32) * inv_b
           - mean * mean)
    var = jnp.maximum(var, 0.0)          # f32 cancellation guard before rsqrt

    # BatchNorm + affine folded into a single scale/shift FMA.
    scale = gamma_ref[...] * jax.lax.rsqrt(var + BN_EPS)
    shift = beta_ref[...] - mean * scale
    h = jnp.maximum(h * scale + shift, 0.0)

    # hidden layer on cat([h, action], 1) as a split matmul
    x = (jnp.dot(h, w2h_ref[...], preferred_element_type=jnp.float32)
         + jnp.dot(act_ref[...], w2a_ref[...], preferred_element_type=jnp.float32)
         + b2_ref[...])
    x = jnp.maximum(x, 0.0)

    # output layer: true (TB, 1) column store
    out_ref[...] = (jnp.dot(x, w3_ref[...], preferred_element_type=jnp.float32)
                    + b3_ref[...]).astype(out_ref.dtype)


def _stats_kernel(obs_ref, w1_ref, sum_ref, sq_ref, *, tb):
    """Pass 1: per-core partial sum / sum-of-squares of layer-1 output.
    Grid = (STATS_SPLIT 'parallel', tiles-per-core 'arbitrary'); each core
    accumulates into its own (1, Hp) output row."""
    @pl.when(pl.program_id(1) == 0)
    def _():
        sum_ref[...] = jnp.zeros_like(sum_ref)
        sq_ref[...] = jnp.zeros_like(sq_ref)

    h = jnp.dot(obs_ref[...], w1_ref[...], preferred_element_type=jnp.float32)
    ones_row = jnp.ones((1, tb), jnp.float32)
    sum_ref[...] += jnp.dot(ones_row, h, preferred_element_type=jnp.float32)
    sq_ref[...] += jnp.dot(ones_row, h * h, preferred_element_type=jnp.float32)


def _main_kernel(obs_ref, act_ref, sum_ref, sq_ref, gamma_ref, beta_ref,
                 w1_ref, w2h_ref, w2a_ref, b2_ref, w3_ref, b3_ref,
                 out_ref, *, inv_batch):
    """Pass 2: layer 1 (recomputed; cheaper than round-tripping h through HBM
    for small H), fused BN scale/shift, layers 2 and 3."""
    h = jnp.dot(obs_ref[...], w1_ref[...], preferred_element_type=jnp.float32)

    # combine per-core partials (STATS_SPLIT rows)
    mean = jnp.sum(sum_ref[...], axis=0, keepdims=True) * inv_batch
    var = jnp.sum(sq_ref[...], axis=0, keepdims=True) * inv_batch - mean * mean
    var = jnp.maximum(var, 0.0)          # f32 cancellation guard before rsqrt
    scale = gamma_ref[...] * jax.lax.rsqrt(var + BN_EPS)
    shift = beta_ref[...] - mean * scale
    h = jnp.maximum(h * scale + shift, 0.0)

    x = (jnp.dot(h, w2h_ref[...], preferred_element_type=jnp.float32)
         + jnp.dot(act_ref[...], w2a_ref[...], preferred_element_type=jnp.float32)
         + b2_ref[...])
    x = jnp.maximum(x, 0.0)

    out_ref[...] = (jnp.dot(x, w3_ref[...], preferred_element_type=jnp.float32)
                    + b3_ref[...]).astype(out_ref.dtype)


# ---------------------------------------------------------------------------
# Wrapper
# ---------------------------------------------------------------------------
def critic_forward(obs, action, padded_params, *, block_b=1024):
    """Full Critic forward. `padded_params` come from pad_params()."""
    p = padded_params
    B, n_obs = obs.shape
    n_actions = action.shape[1]
    Hp = p["w1"].shape[1]

    # Batch tile: sublane-aligned, as large as block_b; on the gridded path
    # keep >= MIN_GRID_TILES tiles so the "parallel" axis feeds both v7x TCs.
    TB = min(block_b, _round_up(B, 8))
    nbt = pl.cdiv(B, TB)
    if nbt > 1:
        TB = min(TB, max(8, _round_up(pl.cdiv(B, MIN_GRID_TILES), 8)))
        nbt = pl.cdiv(B, TB)

    def cparams(sems):
        return pltpu.CompilerParams(dimension_semantics=sems,
                                    vmem_limit_bytes=VMEM_LIMIT)

    def resident(arr):                    # VMEM-resident across grid steps
        return pl.BlockSpec(arr.shape, lambda *_: (0, 0))

    if nbt == 1:
        # Small-batch fast path: single fused kernel, one launch.
        Bp = TB
        obs_p = jnp.pad(obs.astype(jnp.float32), ((0, Bp - B), (0, 0)))
        act_p = jnp.pad(action.astype(jnp.float32), ((0, Bp - B), (0, 0)))
        y_p = pl.pallas_call(
            functools.partial(_fused_kernel, tb=TB, batch=B),
            out_shape=jax.ShapeDtypeStruct((Bp, 1), jnp.float32),
            grid=(1,),
            in_specs=[pl.BlockSpec((TB, n_obs), lambda i: (i, 0)),
                      pl.BlockSpec((TB, n_actions), lambda i: (i, 0)),
                      resident(p["gamma"]), resident(p["beta"]),
                      resident(p["w1"]), resident(p["w2h"]),
                      resident(p["w2a"]), resident(p["b2"]),
                      resident(p["w3"]), resident(p["b3"])],
            out_specs=pl.BlockSpec((TB, 1), lambda i: (i, 0)),
            compiler_params=cparams(("arbitrary",)),
        )(obs_p, act_p, p["gamma"], p["beta"], p["w1"],
          p["w2h"], p["w2a"], p["b2"], p["w3"], p["b3"])
        return y_p[:B]

    # Gridded two-pass BN path. Row-pad the batch so every tile is full; the
    # zero rows are load-bearing for the unmasked BN reductions (h == 0 there).
    nbt_half = pl.cdiv(nbt, STATS_SPLIT)
    nbt = STATS_SPLIT * nbt_half
    Bp = nbt * TB
    obs_p = jnp.pad(obs.astype(jnp.float32), ((0, Bp - B), (0, 0)))
    act_p = jnp.pad(action.astype(jnp.float32), ((0, Bp - B), (0, 0)))

    # Pass 1: per-core partial BN statistics across batch tiles.
    bn_sum, bn_sq = pl.pallas_call(
        functools.partial(_stats_kernel, tb=TB),
        out_shape=(jax.ShapeDtypeStruct((STATS_SPLIT, Hp), jnp.float32),
                   jax.ShapeDtypeStruct((STATS_SPLIT, Hp), jnp.float32)),
        grid=(STATS_SPLIT, nbt_half),
        in_specs=[pl.BlockSpec((TB, n_obs),
                               lambda c, i: (c * nbt_half + i, 0)),
                  resident(p["w1"])],
        out_specs=(pl.BlockSpec((1, Hp), lambda c, i: (c, 0)),
                   pl.BlockSpec((1, Hp), lambda c, i: (c, 0))),
        compiler_params=cparams(("parallel", "arbitrary")),
    )(obs_p, p["w1"])

    # Pass 2: normalize + layers 2/3, pipelined over batch tiles.
    y_p = pl.pallas_call(
        functools.partial(_main_kernel, inv_batch=1.0 / B),
        out_shape=jax.ShapeDtypeStruct((Bp, 1), jnp.float32),
        grid=(nbt,),
        in_specs=[pl.BlockSpec((TB, n_obs), lambda i: (i, 0)),
                  pl.BlockSpec((TB, n_actions), lambda i: (i, 0)),
                  resident(bn_sum), resident(bn_sq),
                  resident(p["gamma"]), resident(p["beta"]),
                  resident(p["w1"]), resident(p["w2h"]),
                  resident(p["w2a"]), resident(p["b2"]),
                  resident(p["w3"]), resident(p["b3"])],
        out_specs=pl.BlockSpec((TB, 1), lambda i: (i, 0)),
        compiler_params=cparams(("parallel",)),
    )(obs_p, act_p, bn_sum, bn_sq, p["gamma"], p["beta"],
      p["w1"], p["w2h"], p["w2a"], p["b2"], p["w3"], p["b3"])
    return y_p[:B]


# ---------------------------------------------------------------------------
# Parameters
# ---------------------------------------------------------------------------
def init_params(key, n_obs, n_hidden, n_actions):
    """PyTorch-Linear-style init; weights stored transposed to (in, out)."""
    ks = jax.random.split(key, 6)

    def lin(kw, kb, fan_in, fan_out):
        bound = 1.0 / jnp.sqrt(jnp.float32(fan_in))
        w = jax.random.uniform(kw, (fan_in, fan_out), jnp.float32, -bound, bound)
        b = jax.random.uniform(kb, (1, fan_out), jnp.float32, -bound, bound)
        return w, b

    w1, b1 = lin(ks[0], ks[1], n_obs, n_hidden)
    w2, b2 = lin(ks[2], ks[3], n_hidden + n_actions, n_hidden)
    w3, b3 = lin(ks[4], ks[5], n_hidden, 1)
    return {
        "w1": w1, "b1": b1,
        "gamma": jnp.ones((1, n_hidden), jnp.float32),
        "beta": jnp.zeros((1, n_hidden), jnp.float32),
        "w2h": w2[:n_hidden, :], "w2a": w2[n_hidden:, :], "b2": b2,
        "w3": w3, "b3": b3,
    }


def pad_params(params, n_obs, n_hidden, n_actions, lane=LANE):
    """Zero-pad only the weight OUTPUT dims to 128 lanes (done once, off the
    hot path).  Inputs (obs/action features) and the scalar output stay
    unpadded.  Zero padding keeps the math identical: padded hidden columns
    stay exactly zero through BN (gamma_pad = 0) and layers 2/3.  b1 is
    dropped: a per-feature bias is exactly cancelled by training-mode BN."""
    Hp = _round_up(n_hidden, lane)
    return {
        "w1": _pad2(params["w1"], n_obs, Hp),
        "gamma": _pad2(params["gamma"], 1, Hp),
        "beta": _pad2(params["beta"], 1, Hp),
        "w2h": _pad2(params["w2h"], Hp, Hp),
        "w2a": _pad2(params["w2a"], n_actions, Hp),
        "b2": _pad2(params["b2"], 1, Hp),
        "w3": _pad2(params["w3"], Hp, 1),
        "b3": params["b3"],
    }


def critic_reference(obs, action, params):
    """Pure-JAX reference of the same forward pass (sanity check; includes b1,
    which the kernel omits because training-mode BN cancels it exactly)."""
    h = obs @ params["w1"] + params["b1"]
    mean = jnp.mean(h, axis=0, keepdims=True)
    var = jnp.mean((h - mean) ** 2, axis=0, keepdims=True)
    h = (h - mean) / jnp.sqrt(var + BN_EPS) * params["gamma"] + params["beta"]
    h = jnp.maximum(h, 0.0)
    x = h @ params["w2h"] + action @ params["w2a"] + params["b2"]
    x = jnp.maximum(x, 0.0)
    return x @ params["w3"] + params["b3"]


if __name__ == "__main__":
    n_obs, n_hidden, n_actions = 16, 32, 8
    key = jax.random.PRNGKey(0)
    k_obs, k_act, k_par, k_obs2, k_act2 = jax.random.split(key, 5)

    params = init_params(k_par, n_obs, n_hidden, n_actions)
    padded = pad_params(params, n_obs, n_hidden, n_actions)

    # --- small batch: exercises the fused single-launch fast path ---
    B1 = 8
    obs1 = jax.random.normal(k_obs, (B1, n_obs), jnp.float32)
    act1 = jax.random.normal(k_act, (B1, n_actions), jnp.float32)
    out1 = jax.block_until_ready(jax.jit(critic_forward)(obs1, act1, padded))
    ref1 = critic_reference(obs1, act1, params)
    assert out1.shape == (B1, 1), out1.shape
    assert jnp.allclose(out1, ref1, atol=1e-4, rtol=1e-4), (out1, ref1)

    # --- larger batch, small tile: exercises the gridded two-pass BN path
    #     (split stats accumulators + parallel batch tiles) ---
    B2 = 200
    obs2 = jax.random.normal(k_obs2, (B2, n_obs), jnp.float32)
    act2 = jax.random.normal(k_act2, (B2, n_actions), jnp.float32)
    fwd2 = jax.jit(functools.partial(critic_forward, block_b=64))
    out2 = jax.block_until_ready(fwd2(obs2, act2, padded))
    ref2 = critic_reference(obs2, act2, params)
    assert out2.shape == (B2, 1), out2.shape
    assert jnp.allclose(out2, ref2, atol=1e-4, rtol=1e-4), (out2, ref2)

    print("KERNEL_OK")
</pallas_src>

<mosaic_0001>
module attributes {stable_mosaic.version = 11 : i64} {
  func.func @_fused_kernel(%arg0: i32, %arg1: memref<8x16xf32, #tpu.memory_space<vmem>>, %arg2: memref<8x8xf32, #tpu.memory_space<vmem>>, %arg3: memref<1x128xf32, #tpu.memory_space<vmem>>, %arg4: memref<1x128xf32, #tpu.memory_space<vmem>>, %arg5: memref<16x128xf32, #tpu.memory_space<vmem>>, %arg6: memref<128x128xf32, #tpu.memory_space<vmem>>, %arg7: memref<8x128xf32, #tpu.memory_space<vmem>>, %arg8: memref<1x128xf32, #tpu.memory_space<vmem>>, %arg9: memref<128x1xf32, #tpu.memory_space<vmem>>, %arg10: memref<1x1xf32, #tpu.memory_space<vmem>>, %arg11: memref<8x1xf32, #tpu.memory_space<vmem>>) attributes {dimension_semantics = [#tpu.dimension_semantics<arbitrary>], iteration_bounds = array<i64: 1>, scalar_prefetch = 0 : i64, scratch_operands = 0 : i64, tpu.core_type = #tpu.core_type<tc>, window_params = [{transform_indices = @transform_0, window_bounds = array<i64: 8, 16>}, {transform_indices = @transform_1, window_bounds = array<i64: 8, 8>}, {pipeline_mode = #tpu.pipeline_mode<synchronous>, transform_indices = @transform_2, window_bounds = array<i64: 1, 128>}, {pipeline_mode = #tpu.pipeline_mode<synchronous>, transform_indices = @transform_3, window_bounds = array<i64: 1, 128>}, {pipeline_mode = #tpu.pipeline_mode<synchronous>, transform_indices = @transform_4, window_bounds = array<i64: 16, 128>}, {pipeline_mode = #tpu.pipeline_mode<synchronous>, transform_indices = @transform_5, window_bounds = array<i64: 128, 128>}, {pipeline_mode = #tpu.pipeline_mode<synchronous>, transform_indices = @transform_6, window_bounds = array<i64: 8, 128>}, {pipeline_mode = #tpu.pipeline_mode<synchronous>, transform_indices = @transform_7, window_bounds = array<i64: 1, 128>}, {pipeline_mode = #tpu.pipeline_mode<synchronous>, transform_indices = @transform_8, window_bounds = array<i64: 128, 1>}, {pipeline_mode = #tpu.pipeline_mode<synchronous>, transform_indices = @transform_9, window_bounds = array<i64: 1, 1>}, {transform_indices = @transform_10, window_bounds = array<i64: 8, 1>}]} {
    %c0 = arith.constant 0 : index
    %c0_0 = arith.constant 0 : index
    %0 = vector.load %arg1[%c0, %c0_0] : memref<8x16xf32, #tpu.memory_space<vmem>>, vector<8x16xf32>
    %c0_1 = arith.constant 0 : index
    %c0_2 = arith.constant 0 : index
    %1 = vector.load %arg5[%c0_1, %c0_2] : memref<16x128xf32, #tpu.memory_space<vmem>>, vector<16x128xf32>
    %cst = arith.constant dense<0.000000e+00> : vector<8x128xf32>
    %2 = tpu.matmul %0, %1, %cst {dimension_numbers = #tpu.dot_dimension_numbers<[1], [0], [0], [1], [0, 0, 1, 1], [], []>} : vector<8x16xf32>, vector<16x128xf32>, vector<8x128xf32> -> vector<8x128xf32>
    %cst_3 = arith.constant 1.000000e+00 : f32
    %3 = vector.broadcast %cst_3 : f32 to vector<1x8xf32>
    %cst_4 = arith.constant dense<0.000000e+00> : vector<1x128xf32>
    %4 = tpu.matmul %3, %2, %cst_4 {dimension_numbers = #tpu.dot_dimension_numbers<[1], [0], [0], [1], [0, 0, 1, 1], [], []>} : vector<1x8xf32>, vector<8x128xf32>, vector<1x128xf32> -> vector<1x128xf32>
    %cst_5 = arith.constant 1.250000e-01 : f32
    %5 = vector.broadcast %cst_5 : f32 to vector<1x128xf32>
    %6 = arith.mulf %4, %5 : vector<1x128xf32>
    %7 = arith.mulf %2, %2 : vector<8x128xf32>
    %cst_6 = arith.constant dense<0.000000e+00> : vector<1x128xf32>
    %8 = tpu.matmul %3, %7, %cst_6 {dimension_numbers = #tpu.dot_dimension_numbers<[1], [0], [0], [1], [0, 0, 1, 1], [], []>} : vector<1x8xf32>, vector<8x128xf32>, vector<1x128xf32> -> vector<1x128xf32>
    %cst_7 = arith.constant 1.250000e-01 : f32
    %9 = vector.broadcast %cst_7 : f32 to vector<1x128xf32>
    %10 = arith.mulf %8, %9 : vector<1x128xf32>
    %11 = arith.mulf %6, %6 : vector<1x128xf32>
    %12 = arith.subf %10, %11 : vector<1x128xf32>
    %cst_8 = arith.constant 0.000000e+00 : f32
    %13 = vector.broadcast %cst_8 : f32 to vector<1x128xf32>
    %14 = arith.maximumf %12, %13 : vector<1x128xf32>
    %c0_9 = arith.constant 0 : index
    %c0_10 = arith.constant 0 : index
    %15 = vector.load %arg3[%c0_9, %c0_10] : memref<1x128xf32, #tpu.memory_space<vmem>>, vector<1x128xf32>
    %cst_11 = arith.constant 9.99999974E-6 : f32
    %16 = vector.broadcast %cst_11 : f32 to vector<1x128xf32>
    %17 = arith.addf %14, %16 : vector<1x128xf32>
    %18 = math.rsqrt %17 : vector<1x128xf32>
    %19 = arith.mulf %15, %18 : vector<1x128xf32>
    %c0_12 = arith.constant 0 : index
    %c0_13 = arith.constant 0 : index
    %20 = vector.load %arg4[%c0_12, %c0_13] : memref<1x128xf32, #tpu.memory_space<vmem>>, vector<1x128xf32>
    %21 = arith.mulf %6, %19 : vector<1x128xf32>
    %22 = arith.subf %20, %21 : vector<1x128xf32>
    %23 = vector.broadcast %19 : vector<1x128xf32> to vector<8x128xf32>
    %24 = arith.mulf %2, %23 : vector<8x128xf32>
    %25 = vector.broadcast %22 : vector<1x128xf32> to vector<8x128xf32>
    %26 = arith.addf %24, %25 : vector<8x128xf32>
    %cst_14 = arith.constant 0.000000e+00 : f32
    %27 = vector.broadcast %cst_14 : f32 to vector<8x128xf32>
    %28 = arith.maximumf %26, %27 : vector<8x128xf32>
    %c0_15 = arith.constant 0 : index
    %c0_16 = arith.constant 0 : index
    %29 = vector.load %arg6[%c0_15, %c0_16] : memref<128x128xf32, #tpu.memory_space<vmem>>, vector<128x128xf32>
    %cst_17 = arith.constant dense<0.000000e+00> : vector<8x128xf32>
    %30 = tpu.matmul %28, %29, %cst_17 {dimension_numbers = #tpu.dot_dimension_numbers<[1], [0], [0], [1], [0, 0, 1, 1], [], []>} : vector<8x128xf32>, vector<128x128xf32>, vector<8x128xf32> -> vector<8x128xf32>
    %c0_18 = arith.constant 0 : index
    %c0_19 = arith.constant 0 : index
    %31 = vector.load %arg2[%c0_18, %c0_19] : memref<8x8xf32, #tpu.memory_space<vmem>>, vector<8x8xf32>
    %c0_20 = arith.constant 0 : index
    %c0_21 = arith.constant 0 : index
    %32 = vector.load %arg7[%c0_20, %c0_21] : memref<8x128xf32, #tpu.memory_space<vmem>>, vector<8x128xf32>
    %cst_22 = arith.constant dense<0.000000e+00> : vector<8x128xf32>
    %33 = tpu.matmul %31, %32, %cst_22 {dimension_numbers = #tpu.dot_dimension_numbers<[1], [0], [0], [1], [0, 0, 1, 1], [], []>} : vector<8x8xf32>, vector<8x128xf32>, vector<8x128xf32> -> vector<8x128xf32>
    %34 = arith.addf %30, %33 : vector<8x128xf32>
    %c0_23 = arith.constant 0 : index
    %c0_24 = arith.constant 0 : index
    %35 = vector.load %arg8[%c0_23, %c0_24] : memref<1x128xf32, #tpu.memory_space<vmem>>, vector<1x128xf32>
    %36 = vector.broadcast %35 : vector<1x128xf32> to vector<8x128xf32>
    %37 = arith.addf %34, %36 : vector<8x128xf32>
    %cst_25 = arith.constant 0.000000e+00 : f32
    %38 = vector.broadcast %cst_25 : f32 to vector<8x128xf32>
    %39 = arith.maximumf %37, %38 : vector<8x128xf32>
    %c0_26 = arith.constant 0 : index
    %c0_27 = arith.constant 0 : index
    %40 = vector.load %arg9[%c0_26, %c0_27] : memref<128x1xf32, #tpu.memory_space<vmem>>, vector<128x1xf32>
    %cst_28 = arith.constant dense<0.000000e+00> : vector<8x1xf32>
    %41 = tpu.matmul %39, %40, %cst_28 {dimension_numbers = #tpu.dot_dimension_numbers<[1], [0], [0], [1], [0, 0, 1, 1], [], []>} : vector<8x128xf32>, vector<128x1xf32>, vector<8x1xf32> -> vector<8x1xf32>
    %c0_29 = arith.constant 0 : index
    %c0_30 = arith.constant 0 : index
    %42 = vector.load %arg10[%c0_29, %c0_30] : memref<1x1xf32, #tpu.memory_space<vmem>>, vector<1x1xf32>
    %43 = vector.broadcast %42 : vector<1x1xf32> to vector<8x1xf32>
    %44 = arith.addf %41, %43 : vector<8x1xf32>
    %c0_31 = arith.constant 0 : index
    %c0_32 = arith.constant 0 : index
    %45 = vector.load %arg11[%c0_31, %c0_32] : memref<8x1xf32, #tpu.memory_space<vmem>>, vector<8x1xf32>
    tpu.vector_store %arg11[%c0_31, %c0_32], %44 {strides = array<i32>} : memref<8x1xf32, #tpu.memory_space<vmem>>, vector<8x1xf32>,
    return
  }
  func.func @transform_0(%arg0: i32) -> (i32, i32) {
    %c0_i32 = arith.constant 0 : i32
    %c0_i32_0 = arith.constant 0 : i32
    return %arg0, %c0_i32 : i32, i32
  }
  func.func @transform_1(%arg0: i32) -> (i32, i32) {
    %c0_i32 = arith.constant 0 : i32
    %c0_i32_0 = arith.constant 0 : i32
    return %arg0, %c0_i32 : i32, i32
  }
  func.func @transform_2(%arg0: i32) -> (i32, i32) {
    %c0_i32 = arith.constant 0 : i32
    %c0_i32_0 = arith.constant 0 : i32
    %c0_i32_1 = arith.constant 0 : i32
    return %c0_i32, %c0_i32_0 : i32, i32
  }
  func.func @transform_3(%arg0: i32) -> (i32, i32) {
    %c0_i32 = arith.constant 0 : i32
    %c0_i32_0 = arith.constant 0 : i32
    %c0_i32_1 = arith.constant 0 : i32
    return %c0_i32, %c0_i32_0 : i32, i32
  }
  func.func @transform_4(%arg0: i32) -> (i32, i32) {
    %c0_i32 = arith.constant 0 : i32
    %c0_i32_0 = arith.constant 0 : i32
    %c0_i32_1 = arith.constant 0 : i32
    return %c0_i32, %c0_i32_0 : i32, i32
  }
  func.func @transform_5(%arg0: i32) -> (i32, i32) {
    %c0_i32 = arith.constant 0 : i32
    %c0_i32_0 = arith.constant 0 : i32
    %c0_i32_1 = arith.constant 0 : i32
    return %c0_i32, %c0_i32_0 : i32, i32
  }
  func.func @transform_6(%arg0: i32) -> (i32, i32) {
    %c0_i32 = arith.constant 0 : i32
    %c0_i32_0 = arith.constant 0 : i32
    %c0_i32_1 = arith.constant 0 : i32
    return %c0_i32, %c0_i32_0 : i32, i32
  }
  func.func @transform_7(%arg0: i32) -> (i32, i32) {
    %c0_i32 = arith.constant 0 : i32
    %c0_i32_0 = arith.constant 0 : i32
    %c0_i32_1 = arith.constant 0 : i32
    return %c0_i32, %c0_i32_0 : i32, i32
  }
  func.func @transform_8(%arg0: i32) -> (i32, i32) {
    %c0_i32 = arith.constant 0 : i32
    %c0_i32_0 = arith.constant 0 : i32
    %c0_i32_1 = arith.constant 0 : i32
    return %c0_i32, %c0_i32_0 : i32, i32
  }
  func.func @transform_9(%arg0: i32) -> (i32, i32) {
    %c0_i32 = arith.constant 0 : i32
    %c0_i32_0 = arith.constant 0 : i32
    %c0_i32_1 = arith.constant 0 : i32
    return %c0_i32, %c0_i32_0 : i32, i32
  }
  func.func @transform_10(%arg0: i32) -> (i32, i32) {
    %c0_i32 = arith.constant 0 : i32
    %c0_i32_0 = arith.constant 0 : i32
    return %arg0, %c0_i32 : i32, i32
  }
}

</mosaic_0001>

<llo_original>
// kernel: critic_forward.1
$region0: #{critic_forward.1}
  #allocation0 [shape = 'u32[]', space=smem, size = 0x4, offset = 0x4, fixed_abs, tag = 'smem constant byte address 0x4 - core index']
  #allocation1 [shape = 'u32[144,128]{1,0:T(1,128)}', space=vmem, size = 0x12000, scoped, tag = 'internal scratch']
  #allocation2 [shape = 'f32[1,1]{1,0:T(1,128)S(1)}', space=vmem, size = 0x200, scoped, tag = 'scoped memory for critic_forward.1']
  %s0 = inlined_call_operand.vmem [shape: f32[8,16], index: 0, kind: input, shape index: {}]
  %s1 = inlined_call_operand.hbm [shape: f32[8,8], index: 1, kind: input, shape index: {}]
  %s2 = inlined_call_operand.vmem [shape: f32[1,128], index: 2, kind: input, shape index: {}]
  %s3 = inlined_call_operand.vmem [shape: f32[1,128], index: 3, kind: input, shape index: {}]
  %s4 = inlined_call_operand.vmem [shape: f32[16,128], index: 4, kind: input, shape index: {}]
  %s5 = inlined_call_operand.vmem [shape: f32[128,128], index: 5, kind: input, shape index: {}]
  %s6 = inlined_call_operand.hbm [shape: f32[8,128], index: 6, kind: input, shape index: {}]
  %s7 = inlined_call_operand.vmem [shape: f32[1,128], index: 7, kind: input, shape index: {}]
  %s8 = inlined_call_operand.vmem [shape: f32[128,1], index: 8, kind: input, shape index: {}]
  %s9 = inlined_call_operand.<no memory space> [shape: f32[1,1], index: 9, kind: input, shape index: {}]
  %s10 = inlined_call_operand.vmem [shape: f32[8,1], index: 10, kind: output, shape index: {}]
  %s11 = sld [smem:[#allocation0]]
  $region58: #{critic_forward.1} parent=0
    _
  %s13 = ssub.s32 1, %s11
  %s14 = scalar_select 0, %s13, %s11
  %v15 = vstv %s9
  %16 = vst [vmem:[#allocation2] sm:$0x1] %v15
  $region1: #{critic_forward.1} parent=0
    #allocation3 [shape = 'u8[4096]{0}', space=vmem, size = 0x1000, scoped, tag = 'input window, operand 1, single buffered']
    #allocation4 [shape = 's32[1]{0}', space=sflag, size = 0x4, scoped, tag = 'scoped memory for critic_forward.1']
    #allocation5 [shape = 'u8[4096]{0}', space=vmem, size = 0x1000, scoped, tag = 'input window, operand 6, single buffered']
    #allocation6 [shape = 's32[1]{0}', space=sflag, size = 0x4, scoped, tag = 'scoped memory for critic_forward.1']
    %17 = vsyncpa [#allocation4], 0
    %18 = vsyncpa [#allocation6], 0
    // Predicated region
    $region2: #{critic_forward.1} parent=1 // pred_check
      _
    $region3: #{critic_forward.1} parent=1 // pred_check_branch
      %20 = sbr.rel (0) target = $region5
    $region4: #{critic_forward.1} parent=1 // pred_region
      _
    $region5: #{critic_forward.1} parent=1 // pred_fallthru
      _
    // Predicated region
    $region6: #{critic_forward.1} parent=1 // pred_check
      _
    $region7: #{critic_forward.1} parent=1 // pred_check_branch
      %22 = sbr.rel (0) target = $region9
    $region8: #{critic_forward.1} parent=1 // pred_region
      %s24 = ssub.s32 128, 128
      %25 = vsyncadd [#allocation4], %s24
      %s27 = sshll.u32 [#allocation3], 4
      %s28 = int_to_ptr.vmem [resolvable:$true] %s27
      %30 = dma.hbm_to_vmem [thread:$0]  %s1, 128, %s28, [#allocation4]
    $region9: #{critic_forward.1} parent=1 // pred_fallthru
      _
    // Predicated region
    $region10: #{critic_forward.1} parent=1 // pred_check
      _
    $region11: #{critic_forward.1} parent=1 // pred_check_branch
      %32 = sbr.rel (0) target = $region13
    $region12: #{critic_forward.1} parent=1 // pred_region
      _
    $region13: #{critic_forward.1} parent=1 // pred_fallthru
      _
    // Predicated region
    $region14: #{critic_forward.1} parent=1 // pred_check
      _
    $region15: #{critic_forward.1} parent=1 // pred_check_branch
      %34 = sbr.rel (0) target = $region17
    $region16: #{critic_forward.1} parent=1 // pred_region
      _
    $region17: #{critic_forward.1} parent=1 // pred_fallthru
      _
    // Predicated region
    $region18: #{critic_forward.1} parent=1 // pred_check
      _
    $region19: #{critic_forward.1} parent=1 // pred_check_branch
      %36 = sbr.rel (0) target = $region21
    $region20: #{critic_forward.1} parent=1 // pred_region
      _
    $region21: #{critic_forward.1} parent=1 // pred_fallthru
      _
    // Predicated region
    $region22: #{critic_forward.1} parent=1 // pred_check
      _
    $region23: #{critic_forward.1} parent=1 // pred_check_branch
      %38 = sbr.rel (0) target = $region25
    $region24: #{critic_forward.1} parent=1 // pred_region
      _
    $region25: #{critic_forward.1} parent=1 // pred_fallthru
      _
    // Predicated region
    $region26: #{critic_forward.1} parent=1 // pred_check
      _
    $region27: #{critic_forward.1} parent=1 // pred_check_branch
      %40 = sbr.rel (0) target = $region29
    $region28: #{critic_forward.1} parent=1 // pred_region
      %s42 = ssub.s32 128, 128
      %43 = vsyncadd [#allocation6], %s42
      %s45 = sshll.u32 [#allocation5], 4
      %s46 = int_to_ptr.vmem [resolvable:$true] %s45
      %48 = dma.hbm_to_vmem [thread:$0]  %s6, 128, %s46, [#allocation6]
    $region29: #{critic_forward.1} parent=1 // pred_fallthru
      _
    // Predicated region
    $region30: #{critic_forward.1} parent=1 // pred_check
      _
    $region31: #{critic_forward.1} parent=1 // pred_check_branch
      %50 = sbr.rel (0) target = $region33
    $region32: #{critic_forward.1} parent=1 // pred_region
      _
    $region33: #{critic_forward.1} parent=1 // pred_fallthru
      _
    // Predicated region
    $region34: #{critic_forward.1} parent=1 // pred_check
      _
    $region35: #{critic_forward.1} parent=1 // pred_check_branch
      %52 = sbr.rel (0) target = $region37
    $region36: #{critic_forward.1} parent=1 // pred_region
      _
    $region37: #{critic_forward.1} parent=1 // pred_fallthru
      _
    // Predicated region
    $region38: #{critic_forward.1} parent=1 // pred_check
      _
    $region39: #{critic_forward.1} parent=1 // pred_check_branch
      %54 = sbr.rel (0) target = $region41
    $region40: #{critic_forward.1} parent=1 // pred_region
      _
    $region41: #{critic_forward.1} parent=1 // pred_fallthru
      _
    // Predicated region
    $region42: #{critic_forward.1} parent=1 // pred_check
      _
    $region43: #{critic_forward.1} parent=1 // pred_check_branch
      %56 = sbr.rel (0) target = $region45
    $region44: #{critic_forward.1} parent=1 // pred_region
      %57 = dma.done [#allocation4], 128
    $region45: #{critic_forward.1} parent=1 // pred_fallthru
      _
    // Predicated region
    $region46: #{critic_forward.1} parent=1 // pred_check
      _
    $region47: #{critic_forward.1} parent=1 // pred_check_branch
      %59 = sbr.rel (0) target = $region49
    $region48: #{critic_forward.1} parent=1 // pred_region
      %60 = dma.done [#allocation6], 128
    $region49: #{critic_forward.1} parent=1 // pred_fallthru
      _
    %v61 = vld [vmem:[%s0] sm:$0xff]
    %v62 = vld [vmem:[%s4] sm:$0xff]
    %v63 = vld [vmem:[%s4 + $0x8] sm:$0xff]
    %vm64 = vcmask 130048
    %v66 = vsel %vm64, %v61, 0
    %68 = vmatprep.subr.mxu0 0.0
    %69 = vmatpush1.msra.mxu0 %v62
    %70 = vmatprep.subr.mxu0 0.0
    %71 = vmatpush1.msra.mxu0 %v63
    %72 = vmatprep.subr.mxu0 0.0
    %73 = vmatpush1.msra.mxu0 0.0
    %74 = vmatprep.subr.mxu0 0.0
    %75 = vmatpush1.msra.mxu0 0.0
    %76 = vmatprep.subr.mxu0 0.0
    %77 = vmatpush1.msra.mxu0 0.0
    %78 = vmatprep.subr.mxu0 0.0
    %79 = vmatpush1.msra.mxu0 0.0
    %80 = vmatprep.subr.mxu0 0.0
    %81 = vmatpush1.msra.mxu0 0.0
    %82 = vmatprep.subr.mxu0 0.0
    %83 = vmatpush1.msra.mxu0 0.0
    %84 = vmatprep.subr.mxu0 0.0
    %85 = vmatpush1.msra.mxu0 0.0
    %86 = vmatprep.subr.mxu0 0.0
    %87 = vmatpush1.msra.mxu0 0.0
    %88 = vmatprep.subr.mxu0 0.0
    %89 = vmatpush1.msra.mxu0 0.0
    %90 = vmatprep.subr.mxu0 0.0
    %91 = vmatpush1.msra.mxu0 0.0
    %92 = vmatprep.subr.mxu0 0.0
    %93 = vmatpush1.msra.mxu0 0.0
    %94 = vmatprep.subr.mxu0 0.0
    %95 = vmatpush1.msra.mxu0 0.0
    %96 = vmatprep.subr.mxu0 0.0
    %97 = vmatpush1.msra.mxu0 0.0
    %98 = vmatprep.subr.mxu0 0.0
    %99 = vmatpush1.msra.mxu0 0.0
    %100 = vmatprep.subr.mxu0 0.0
    %101 = vmatpush1.msra.mxu0 0.0
    %102 = vmatprep.subr.mxu0 0.0
    %103 = vmatpush1.msra.mxu0 0.0
    %104 = vmatprep.subr.mxu0 0.0
    %105 = vmatpush1.msra.mxu0 0.0
    %106 = vmatprep.subr.mxu0 0.0
    %107 = vmatpush1.msra.mxu0 0.0
    %108 = vmatprep.subr.mxu0 0.0
    %109 = vmatpush1.msra.mxu0 0.0
    %110 = vmatprep.subr.mxu0 0.0
    %111 = vmatpush1.msra.mxu0 0.0
    %112 = vmatprep.subr.mxu0 0.0
    %113 = vmatpush1.msra.mxu0 0.0
    %114 = vmatprep.subr.mxu0 0.0
    %115 = vmatpush1.msra.mxu0 0.0
    %116 = vmatprep.subr.mxu0 0.0
    %117 = vmatpush1.msra.mxu0 0.0
    %118 = vmatprep.subr.mxu0 0.0
    %119 = vmatpush1.msra.mxu0 0.0
    %120 = vmatprep.subr.mxu0 0.0
    %121 = vmatpush1.msra.mxu0 0.0
    %122 = vmatprep.subr.mxu0 0.0
    %123 = vmatpush1.msra.mxu0 0.0
    %124 = vmatprep.subr.mxu0 0.0
    %125 = vmatpush1.msra.mxu0 0.0
    %126 = vmatprep.subr.mxu0 0.0
    %127 = vmatpush1.msra.mxu0 0.0
    %128 = vmatprep.subr.mxu0 0.0
    %129 = vmatpush1.msra.mxu0 0.0
    %130 = vmatprep.subr.mxu0 0.0
    %131 = vmatpush1.msra.mxu0 0.0
    %132 = vmatprep.mubr.f32.mxu0 0.0
    %133 = vmatmul.mubr.f32.gmra.mrb[0].mxu0 %v66
    %v134 = vpop.f32.mrb[0].mxu0
    %v135 = vadd.f32 0.0, %v134
    %v136 = vpop.f32.mrb[0].mxu0
    %137 = vdwg.mxu0
    %vm138 = vcmask 64512
    %v140 = vsel %vm138, 1.0, 0
    %142 = vmatprep.subr.mxu0 0.0
    %143 = vmatpush1.msra.mxu0 %v135
    %144 = vmatprep.subr.mxu0 0.0
    %145 = vmatpush1.msra.mxu0 0.0
    %146 = vmatprep.subr.mxu0 0.0
    %147 = vmatpush1.msra.mxu0 0.0
    %148 = vmatprep.subr.mxu0 0.0
    %149 = vmatpush1.msra.mxu0 0.0
    %150 = vmatprep.subr.mxu0 0.0
    %151 = vmatpush1.msra.mxu0 0.0
    %152 = vmatprep.subr.mxu0 0.0
    %153 = vmatpush1.msra.mxu0 0.0
    %154 = vmatprep.subr.mxu0 0.0
    %155 = vmatpush1.msra.mxu0 0.0
    %156 = vmatprep.subr.mxu0 0.0
    %157 = vmatpush1.msra.mxu0 0.0
    %158 = vmatprep.subr.mxu0 0.0
    %159 = vmatpush1.msra.mxu0 0.0
    %160 = vmatprep.subr.mxu0 0.0
    %161 = vmatpush1.msra.mxu0 0.0
    %162 = vmatprep.subr.mxu0 0.0
    %163 = vmatpush1.msra.mxu0 0.0
    %164 = vmatprep.subr.mxu0 0.0
    %165 = vmatpush1.msra.mxu0 0.0
    %166 = vmatprep.subr.mxu0 0.0
    %167 = vmatpush1.msra.mxu0 0.0
    %168 = vmatprep.subr.mxu0 0.0
    %169 = vmatpush1.msra.mxu0 0.0
    %170 = vmatprep.subr.mxu0 0.0
    %171 = vmatpush1.msra.mxu0 0.0
    %172 = vmatprep.subr.mxu0 0.0
    %173 = vmatpush1.msra.mxu0 0.0
    %174 = vmatprep.subr.mxu0 0.0
    %175 = vmatpush1.msra.mxu0 0.0
    %176 = vmatprep.subr.mxu0 0.0
    %177 = vmatpush1.msra.mxu0 0.0
    %178 = vmatprep.subr.mxu0 0.0
    %179 = vmatpush1.msra.mxu0 0.0
    %180 = vmatprep.subr.mxu0 0.0
    %181 = vmatpush1.msra.mxu0 0.0
    %182 = vmatprep.subr.mxu0 0.0
    %183 = vmatpush1.msra.mxu0 0.0
    %184 = vmatprep.subr.mxu0 0.0
    %185 = vmatpush1.msra.mxu0 0.0
    %186 = vmatprep.subr.mxu0 0.0
    %187 = vmatpush1.msra.mxu0 0.0
    %188 = vmatprep.subr.mxu0 0.0
    %189 = vmatpush1.msra.mxu0 0.0
    %190 = vmatprep.subr.mxu0 0.0
    %191 = vmatpush1.msra.mxu0 0.0
    %192 = vmatprep.subr.mxu0 0.0
    %193 = vmatpush1.msra.mxu0 0.0
    %194 = vmatprep.subr.mxu0 0.0
    %195 = vmatpush1.msra.mxu0 0.0
    %196 = vmatprep.subr.mxu0 0.0
    %197 = vmatpush1.msra.mxu0 0.0
    %198 = vmatprep.subr.mxu0 0.0
    %199 = vmatpush1.msra.mxu0 0.0
    %200 = vmatprep.subr.mxu0 0.0
    %201 = vmatpush1.msra.mxu0 0.0
    %202 = vmatprep.subr.mxu0 0.0
    %203 = vmatpush1.msra.mxu0 0.0
    %204 = vmatprep.subr.mxu0 0.0
    %205 = vmatpush1.msra.mxu0 0.0
    %206 = vmatprep.mubr.f32.mxu0 0.0
    %207 = vmatmul.mubr.f32.gmra.mrb[0].mxu0 %v140
    %v208 = vpop.f32.mrb[0].mxu0
    %v209 = vadd.f32 0.0, %v208
    %v210 = vpop.f32.mrb[0].mxu0
    %211 = vdwg.mxu0
    %v212 = vmul.f32 %v209, 0.125
    %v213 = vmul.f32 %v135, %v135
    %214 = vmatprep.subr.mxu0 0.0
    %215 = vmatpush1.msra.mxu0 %v213
    %216 = vmatprep.subr.mxu0 0.0
    %217 = vmatpush1.msra.mxu0 0.0
    %218 = vmatprep.subr.mxu0 0.0
    %219 = vmatpush1.msra.mxu0 0.0
    %220 = vmatprep.subr.mxu0 0.0
    %221 = vmatpush1.msra.mxu0 0.0
    %222 = vmatprep.subr.mxu0 0.0
    %223 = vmatpush1.msra.mxu0 0.0
    %224 = vmatprep.subr.mxu0 0.0
    %225 = vmatpush1.msra.mxu0 0.0
    %226 = vmatprep.subr.mxu0 0.0
    %227 = vmatpush1.msra.mxu0 0.0
    %228 = vmatprep.subr.mxu0 0.0
    %229 = vmatpush1.msra.mxu0 0.0
    %230 = vmatprep.subr.mxu0 0.0
    %231 = vmatpush1.msra.mxu0 0.0
    %232 = vmatprep.subr.mxu0 0.0
    %233 = vmatpush1.msra.mxu0 0.0
    %234 = vmatprep.subr.mxu0 0.0
    %235 = vmatpush1.msra.mxu0 0.0
    %236 = vmatprep.subr.mxu0 0.0
    %237 = vmatpush1.msra.mxu0 0.0
    %238 = vmatprep.subr.mxu0 0.0
    %239 = vmatpush1.msra.mxu0 0.0
    %240 = vmatprep.subr.mxu0 0.0
    %241 = vmatpush1.msra.mxu0 0.0
    %242 = vmatprep.subr.mxu0 0.0
    %243 = vmatpush1.msra.mxu0 0.0
    %244 = vmatprep.subr.mxu0 0.0
    %245 = vmatpush1.msra.mxu0 0.0
    %246 = vmatprep.subr.mxu0 0.0
    %247 = vmatpush1.msra.mxu0 0.0
    %248 = vmatprep.subr.mxu0 0.0
    %249 = vmatpush1.msra.mxu0 0.0
    %250 = vmatprep.subr.mxu0 0.0
    %251 = vmatpush1.msra.mxu0 0.0
    %252 = vmatprep.subr.mxu0 0.0
    %253 = vmatpush1.msra.mxu0 0.0
    %254 = vmatprep.subr.mxu0 0.0
    %255 = vmatpush1.msra.mxu0 0.0
    %256 = vmatprep.subr.mxu0 0.0
    %257 = vmatpush1.msra.mxu0 0.0
    %258 = vmatprep.subr.mxu0 0.0
    %259 = vmatpush1.msra.mxu0 0.0
    %260 = vmatprep.subr.mxu0 0.0
    %261 = vmatpush1.msra.mxu0 0.0
    %262 = vmatprep.subr.mxu0 0.0
    %263 = vmatpush1.msra.mxu0 0.0
    %264 = vmatprep.subr.mxu0 0.0
    %265 = vmatpush1.msra.mxu0 0.0
    %266 = vmatprep.subr.mxu0 0.0
    %267 = vmatpush1.msra.mxu0 0.0
    %268 = vmatprep.subr.mxu0 0.0
    %269 = vmatpush1.msra.mxu0 0.0
    %270 = vmatprep.subr.mxu0 0.0
    %271 = vmatpush1.msra.mxu0 0.0
    %272 = vmatprep.subr.mxu0 0.0
    %273 = vmatpush1.msra.mxu0 0.0
    %274 = vmatprep.subr.mxu0 0.0
    %275 = vmatpush1.msra.mxu0 0.0
    %276 = vmatprep.subr.mxu0 0.0
    %277 = vmatpush1.msra.mxu0 0.0
    %278 = vmatprep.mubr.f32.mxu0 0.0
    %279 = vmatmul.mubr.f32.gmra.mrb[0].mxu0 %v140
    %v280 = vpop.f32.mrb[0].mxu0
    %v281 = vadd.f32 0.0, %v280
    %v282 = vpop.f32.mrb[0].mxu0
    %283 = vdwg.mxu0
    %v284 = vmul.f32 %v281, 0.125
    %v285 = vmul.f32 %v212, %v212
    %v286 = vsub.f32 %v284, %v285
    %v287 = vmax.f32 %v286, 0.0
    %v288 = vld [vmem:[%s2] sm:$0x1]
    %v289 = vadd.f32 %v287, 1e-05
    %v290 = vrsqrt.pop %v289
    %v291 = vmul.f32 %v288, %v290
    %v292 = vld [vmem:[%s3] sm:$0x1]
    %v293 = vmul.f32 %v212, %v291
    %v294 = vsub.f32 %v292, %v293
    %v296 = vlaneseq
    %v297 = vshrl.u32 %v296, 7
    %v298 = vsub.s32 0, %v297
    %v299 = vrot.slane %v291, %v298
    %v301 = vmul.f32 %v135, %v299
    %v303 = vlaneseq
    %v304 = vshrl.u32 %v303, 7
    %v305 = vsub.s32 0, %v304
    %v306 = vrot.slane %v294, %v305
    %v308 = vadd.f32 %v301, %v306
    %v309 = vmax.f32 %v308, 0.0
    %v310 = vld [vmem:[%s5] sm:$0xff]
    %v311 = vld [vmem:[%s5 + $0x8] sm:$0xff]
    %v312 = vld [vmem:[%s5 + $0x10] sm:$0xff]
    %v313 = vld [vmem:[%s5 + $0x18] sm:$0xff]
    %v314 = vld [vmem:[%s5 + $0x20] sm:$0xff]
    %v315 = vld [vmem:[%s5 + $0x28] sm:$0xff]
    %v316 = vld [vmem:[%s5 + $0x30] sm:$0xff]
    %v317 = vld [vmem:[%s5 + $0x38] sm:$0xff]
    %v318 = vld [vmem:[%s5 + $0x40] sm:$0xff]
    %v319 = vld [vmem:[%s5 + $0x48] sm:$0xff]
    %v320 = vld [vmem:[%s5 + $0x50] sm:$0xff]
    %v321 = vld [vmem:[%s5 + $0x58] sm:$0xff]
    %v322 = vld [vmem:[%s5 + $0x60] sm:$0xff]
    %v323 = vld [vmem:[%s5 + $0x68] sm:$0xff]
    %v324 = vld [vmem:[%s5 + $0x70] sm:$0xff]
    %v325 = vld [vmem:[%s5 + $0x78] sm:$0xff]
    %v326 = vld [vmem:[#allocation3] sm:$0xff]
    %v327 = vld [vmem:[#allocation5] sm:$0xff]
    %v329 = vsel %vm138, %v326, 0
    %331 = vmatprep.subr.mxu0 0.0
    %332 = vmatpush1.msra.mxu0 %v327
    %333 = vmatprep.subr.mxu0 0.0
    %334 = vmatpush1.msra.mxu0 0.0
    %335 = vmatprep.subr.mxu0 0.0
    %336 = vmatpush1.msra.mxu0 0.0
    %337 = vmatprep.subr.mxu0 0.0
    %338 = vmatpush1.msra.mxu0 0.0
    %339 = vmatprep.subr.mxu0 0.0
    %340 = vmatpush1.msra.mxu0 0.0
    %341 = vmatprep.subr.mxu0 0.0
    %342 = vmatpush1.msra.mxu0 0.0
    %343 = vmatprep.subr.mxu0 0.0
    %344 = vmatpush1.msra.mxu0 0.0
    %345 = vmatprep.subr.mxu0 0.0
    %346 = vmatpush1.msra.mxu0 0.0
    %347 = vmatprep.subr.mxu0 0.0
    %348 = vmatpush1.msra.mxu0 0.0
    %349 = vmatprep.subr.mxu0 0.0
    %350 = vmatpush1.msra.mxu0 0.0
    %351 = vmatprep.subr.mxu0 0.0
    %352 = vmatpush1.msra.mxu0 0.0
    %353 = vmatprep.subr.mxu0 0.0
    %354 = vmatpush1.msra.mxu0 0.0
    %355 = vmatprep.subr.mxu0 0.0
    %356 = vmatpush1.msra.mxu0 0.0
    %357 = vmatprep.subr.mxu0 0.0
    %358 = vmatpush1.msra.mxu0 0.0
    %359 = vmatprep.subr.mxu0 0.0
    %360 = vmatpush1.msra.mxu0 0.0
    %361 = vmatprep.subr.mxu0 0.0
    %362 = vmatpush1.msra.mxu0 0.0
    %363 = vmatprep.subr.mxu0 0.0
    %364 = vmatpush1.msra.mxu0 0.0
    %365 = vmatprep.subr.mxu0 0.0
    %366 = vmatpush1.msra.mxu0 0.0
    %367 = vmatprep.subr.mxu0 0.0
    %368 = vmatpush1.msra.mxu0 0.0
    %369 = vmatprep.subr.mxu0 0.0
    %370 = vmatpush1.msra.mxu0 0.0
    %371 = vmatprep.subr.mxu0 0.0
    %372 = vmatpush1.msra.mxu0 0.0
    %373 = vmatprep.subr.mxu0 0.0
    %374 = vmatpush1.msra.mxu0 0.0
    %375 = vmatprep.subr.mxu0 0.0
    %376 = vmatpush1.msra.mxu0 0.0
    %377 = vmatprep.subr.mxu0 0.0
    %378 = vmatpush1.msra.mxu0 0.0
    %379 = vmatprep.subr.mxu0 0.0
    %380 = vmatpush1.msra.mxu0 0.0
    %381 = vmatprep.subr.mxu0 0.0
    %382 = vmatpush1.msra.mxu0 0.0
    %383 = vmatprep.subr.mxu0 0.0
    %384 = vmatpush1.msra.mxu0 0.0
    %385 = vmatprep.subr.mxu0 0.0
    %386 = vmatpush1.msra.mxu0 0.0
    %387 = vmatprep.subr.mxu0 0.0
    %388 = vmatpush1.msra.mxu0 0.0
    %389 = vmatprep.subr.mxu0 0.0
    %390 = vmatpush1.msra.mxu0 0.0
    %391 = vmatprep.subr.mxu0 0.0
    %392 = vmatpush1.msra.mxu0 0.0
    %393 = vmatprep.subr.mxu0 0.0
    %394 = vmatpush1.msra.mxu0 0.0
    %395 = vmatprep.mubr.f32.mxu0 0.0
    %396 = vmatmul.mubr.f32.gmra.mrb[0].mxu0 %v329
    %v397 = vpop.f32.mrb[0].mxu0
    %v398 = vadd.f32 0.0, %v397
    %v399 = vpop.f32.mrb[0].mxu0
    %400 = vdwg.mxu0
    %401 = vmatprep.subr.mxu0 0.0
    %402 = vmatpush1.msra.mxu0 %v310
    %403 = vmatprep.subr.mxu0 0.0
    %404 = vmatpush1.msra.mxu0 %v311
    %405 = vmatprep.subr.mxu0 0.0
    %406 = vmatpush1.msra.mxu0 %v312
    %407 = vmatprep.subr.mxu0 0.0
    %408 = vmatpush1.msra.mxu0 %v313
    %409 = vmatprep.subr.mxu0 0.0
    %410 = vmatpush1.msra.mxu0 %v314
    %411 = vmatprep.subr.mxu0 0.0
    %412 = vmatpush1.msra.mxu0 %v315
    %413 = vmatprep.subr.mxu0 0.0
    %414 = vmatpush1.msra.mxu0 %v316
    %415 = vmatprep.subr.mxu0 0.0
    %416 = vmatpush1.msra.mxu0 %v317
    %417 = vmatprep.subr.mxu0 0.0
    %418 = vmatpush1.msra.mxu0 %v318
    %419 = vmatprep.subr.mxu0 0.0
    %420 = vmatpush1.msra.mxu0 %v319
    %421 = vmatprep.subr.mxu0 0.0
    %422 = vmatpush1.msra.mxu0 %v320
    %423 = vmatprep.subr.mxu0 0.0
    %424 = vmatpush1.msra.mxu0 %v321
    %425 = vmatprep.subr.mxu0 0.0
    %426 = vmatpush1.msra.mxu0 %v322
    %427 = vmatprep.subr.mxu0 0.0
    %428 = vmatpush1.msra.mxu0 %v323
    %429 = vmatprep.subr.mxu0 0.0
    %430 = vmatpush1.msra.mxu0 %v324
    %431 = vmatprep.subr.mxu0 0.0
    %432 = vmatpush1.msra.mxu0 %v325
    %433 = vmatprep.subr.mxu0 0.0
    %434 = vmatpush1.msra.mxu0 0.0
    %435 = vmatprep.subr.mxu0 0.0
    %436 = vmatpush1.msra.mxu0 0.0
    %437 = vmatprep.subr.mxu0 0.0
    %438 = vmatpush1.msra.mxu0 0.0
    %439 = vmatprep.subr.mxu0 0.0
    %440 = vmatpush1.msra.mxu0 0.0
    %441 = vmatprep.subr.mxu0 0.0
    %442 = vmatpush1.msra.mxu0 0.0
    %443 = vmatprep.subr.mxu0 0.0
    %444 = vmatpush1.msra.mxu0 0.0
    %445 = vmatprep.subr.mxu0 0.0
    %446 = vmatpush1.msra.mxu0 0.0
    %447 = vmatprep.subr.mxu0 0.0
    %448 = vmatpush1.msra.mxu0 0.0
    %449 = vmatprep.subr.mxu0 0.0
    %450 = vmatpush1.msra.mxu0 0.0
    %451 = vmatprep.subr.mxu0 0.0
    %452 = vmatpush1.msra.mxu0 0.0
    %453 = vmatprep.subr.mxu0 0.0
    %454 = vmatpush1.msra.mxu0 0.0
    %455 = vmatprep.subr.mxu0 0.0
    %456 = vmatpush1.msra.mxu0 0.0
    %457 = vmatprep.subr.mxu0 0.0
    %458 = vmatpush1.msra.mxu0 0.0
    %459 = vmatprep.subr.mxu0 0.0
    %460 = vmatpush1.msra.mxu0 0.0
    %461 = vmatprep.subr.mxu0 0.0
    %462 = vmatpush1.msra.mxu0 0.0
    %463 = vmatprep.subr.mxu0 0.0
    %464 = vmatpush1.msra.mxu0 0.0
    %465 = vmatprep.mubr.f32.mxu0 0.0
    %466 = vmatmul.mubr.f32.gmra.mrb[0].mxu0 %v309
    %v467 = vpop.f32.mrb[0].mxu0
    %v468 = vadd.f32 %v398, %v467
    %v469 = vpop.f32.mrb[0].mxu0
    %470 = vdwg.mxu0
    %v471 = vld [vmem:[%s7] sm:$0x1]
    %v473 = vlaneseq
    %v474 = vshrl.u32 %v473, 7
    %v475 = vsub.s32 0, %v474
    %v476 = vrot.slane %v471, %v475
    %v478 = vadd.f32 %v468, %v476
    %v479 = vmax.f32 %v478, 0.0
    %v480 = vld [vmem:[%s8] sm:$0xff]
    %v481 = vld [vmem:[%s8 + $0x8] sm:$0xff]
    %v482 = vld [vmem:[%s8 + $0x10] sm:$0xff]
    %v483 = vld [vmem:[%s8 + $0x18] sm:$0xff]
    %v484 = vld [vmem:[%s8 + $0x20] sm:$0xff]
    %v485 = vld [vmem:[%s8 + $0x28] sm:$0xff]
    %v486 = vld [vmem:[%s8 + $0x30] sm:$0xff]
    %v487 = vld [vmem:[%s8 + $0x38] sm:$0xff]
    %v488 = vld [vmem:[%s8 + $0x40] sm:$0xff]
    %v489 = vld [vmem:[%s8 + $0x48] sm:$0xff]
    %v490 = vld [vmem:[%s8 + $0x50] sm:$0xff]
    %v491 = vld [vmem:[%s8 + $0x58] sm:$0xff]
    %v492 = vld [vmem:[%s8 + $0x60] sm:$0xff]
    %v493 = vld [vmem:[%s8 + $0x68] sm:$0xff]
    %v494 = vld [vmem:[%s8 + $0x70] sm:$0xff]
    %v495 = vld [vmem:[%s8 + $0x78] sm:$0xff]
    %v496 = vld [vmem:[#allocation2] sm:$0x1]
    %v498 = vlaneseq
    %v499 = vshrl.u32 %v498, 7
    %v500 = vsub.s32 0, %v499
    %v501 = vrot.slane %v496, %v500
    %503 = vmatprep.subr.mxu0 0.0
    %504 = vmatpush1.msra.mxu0 %v480
    %505 = vmatprep.subr.mxu0 0.0
    %506 = vmatpush1.msra.mxu0 %v481
    %507 = vmatprep.subr.mxu0 0.0
    %508 = vmatpush1.msra.mxu0 %v482
    %509 = vmatprep.subr.mxu0 0.0
    %510 = vmatpush1.msra.mxu0 %v483
    %511 = vmatprep.subr.mxu0 0.0
    %512 = vmatpush1.msra.mxu0 %v484
    %513 = vmatprep.subr.mxu0 0.0
    %514 = vmatpush1.msra.mxu0 %v485
    %515 = vmatprep.subr.mxu0 0.0
    %516 = vmatpush1.msra.mxu0 %v486
    %517 = vmatprep.subr.mxu0 0.0
    %518 = vmatpush1.msra.mxu0 %v487
    %519 = vmatprep.subr.mxu0 0.0
    %520 = vmatpush1.msra.mxu0 %v488
    %521 = vmatprep.subr.mxu0 0.0
    %522 = vmatpush1.msra.mxu0 %v489
    %523 = vmatprep.subr.mxu0 0.0
    %524 = vmatpush1.msra.mxu0 %v490
    %525 = vmatprep.subr.mxu0 0.0
    %526 = vmatpush1.msra.mxu0 %v491
    %527 = vmatprep.subr.mxu0 0.0
    %528 = vmatpush1.msra.mxu0 %v492
    %529 = vmatprep.subr.mxu0 0.0
    %530 = vmatpush1.msra.mxu0 %v493
    %531 = vmatprep.subr.mxu0 0.0
    %532 = vmatpush1.msra.mxu0 %v494
    %533 = vmatprep.subr.mxu0 0.0
    %534 = vmatpush1.msra.mxu0 %v495
    %535 = vmatprep.subr.mxu0 0.0
    %536 = vmatpush1.msra.mxu0 0.0
    %537 = vmatprep.subr.mxu0 0.0
    %538 = vmatpush1.msra.mxu0 0.0
    %539 = vmatprep.subr.mxu0 0.0
    %540 = vmatpush1.msra.mxu0 0.0
    %541 = vmatprep.subr.mxu0 0.0
    %542 = vmatpush1.msra.mxu0 0.0
    %543 = vmatprep.subr.mxu0 0.0
    %544 = vmatpush1.msra.mxu0 0.0
    %545 = vmatprep.subr.mxu0 0.0
    %546 = vmatpush1.msra.mxu0 0.0
    %547 = vmatprep.subr.mxu0 0.0
    %548 = vmatpush1.msra.mxu0 0.0
    %549 = vmatprep.subr.mxu0 0.0
    %550 = vmatpush1.msra.mxu0 0.0
    %551 = vmatprep.subr.mxu0 0.0
    %552 = vmatpush1.msra.mxu0 0.0
    %553 = vmatprep.subr.mxu0 0.0
    %554 = vmatpush1.msra.mxu0 0.0
    %555 = vmatprep.subr.mxu0 0.0
    %556 = vmatpush1.msra.mxu0 0.0
    %557 = vmatprep.subr.mxu0 0.0
    %558 = vmatpush1.msra.mxu0 0.0
    %559 = vmatprep.subr.mxu0 0.0
    %560 = vmatpush1.msra.mxu0 0.0
    %561 = vmatprep.subr.mxu0 0.0
    %562 = vmatpush1.msra.mxu0 0.0
    %563 = vmatprep.subr.mxu0 0.0
    %564 = vmatpush1.msra.mxu0 0.0
    %565 = vmatprep.subr.mxu0 0.0
    %566 = vmatpush1.msra.mxu0 0.0
    %567 = vmatprep.mubr.f32.mxu0 0.0
    %568 = vmatmul.mubr.f32.gmra.mrb[0].mxu0 %v479
    %v569 = vpop.f32.mrb[0].mxu0
    %v570 = vadd.f32 %v501, %v569
    %v571 = vpop.f32.mrb[0].mxu0
    %572 = vdwg.mxu0
    %vm573 = vcmask 7168
    %574 = vst.msk [vmem:[%s10] sm:$0xff] %vm573, %v570
    // Predicated region
    $region50: #{critic_forward.1} parent=1 // pred_check
      _
    $region51: #{critic_forward.1} parent=1 // pred_check_branch
      %576 = sbr.rel (0) target = $region53
    $region52: #{critic_forward.1} parent=1 // pred_region
      _
    $region53: #{critic_forward.1} parent=1 // pred_fallthru
      _
    // Predicated region
    $region54: #{critic_forward.1} parent=1 // pred_check
      _
    $region55: #{critic_forward.1} parent=1 // pred_check_branch
      %578 = sbr.rel (0) target = $region57
    $region56: #{critic_forward.1} parent=1 // pred_region
      _
    $region57: #{critic_forward.1} parent=1 // pred_fallthru
      _
    %579 = vsyncpa [#allocation4], 1
    %580 = vsyncpa [#allocation6], 1

</llo_original>
